<compile_context>
chip_gen: v5e
topology: v5e:2x2
jax: 0.10.0
libtpu: 0.0.40
codegen_flags: <defaults>
</compile_context>

<pallas_src>
import functools

import jax
import jax.numpy as jnp
from jax.experimental import pallas as pl
from jax.experimental.pallas import tpu as pltpu


# ----------------------------------------------------------------------------
# Fused kernel: qkv-projection -> multi-head softmax attention -> out-projection
# One grid step handles a block of `bb` batches.
# ----------------------------------------------------------------------------
def _fused_attention_kernel(x_ref, wqkv_ref, wproj_ref, bproj_ref,
                            o_ref, attn_ref, *, bb, seq, num_heads, head_dim):
    N, H, Dh = seq, num_heads, head_dim
    C = H * Dh

    # (bb*N, C) bf16 activations; one MXU pass for the whole batch block.
    x = x_ref[...].astype(jnp.bfloat16)
    qkv = jnp.dot(x, wqkv_ref[...],
                  preferred_element_type=jnp.float32)          # (bb*N, 3C) f32
    # Softmax scale is already folded into the q columns of W_qkv.

    merged_rows = []
    for b in range(bb):                       # static unroll over batches in block
        r0 = b * N

        # --- scores for all heads of this batch --------------------------------
        scores = []
        for h in range(H):                    # static unroll over heads
            q = qkv[r0:r0 + N, h * Dh:(h + 1) * Dh].astype(jnp.bfloat16)
            k = qkv[r0:r0 + N, C + h * Dh:C + (h + 1) * Dh].astype(jnp.bfloat16)
            # s[i, j] = sum_d q[i, d] * k[j, d]   (contract last dims; no transpose)
            s = jax.lax.dot_general(q, k, (((1,), (1,)), ((), ())),
                                    preferred_element_type=jnp.float32)  # (N, N)
            scores.append(s)

        # --- softmax batched over heads, exact normalization --------------------
        s_all = jnp.stack(scores, axis=0)                       # (H, N, N) f32
        s_all = s_all - jnp.max(s_all, axis=-1, keepdims=True)
        e = jnp.exp(s_all)
        p = e / jnp.sum(e, axis=-1, keepdims=True)              # (H, N, N) f32
        attn_ref[b] = p                                         # one full-block store

        # --- attn @ v, heads merged into one (N, C) row block -------------------
        outs = []
        for h in range(H):
            v = qkv[r0:r0 + N, 2 * C + h * Dh:2 * C + (h + 1) * Dh].astype(jnp.bfloat16)
            o_h = jnp.dot(p[h].astype(jnp.bfloat16), v,
                          preferred_element_type=jnp.float32)   # (N, Dh) f32
            outs.append(o_h)
        merged_rows.append(jnp.concatenate(outs, axis=-1))      # (N, C) f32

    merged = merged_rows[0] if bb == 1 else jnp.concatenate(merged_rows, axis=0)
    merged = merged.astype(jnp.bfloat16)                        # (bb*N, C)

    # --- output projection (with bias), single full-block store ----------------
    y = jnp.dot(merged, wproj_ref[...],
                preferred_element_type=jnp.float32) + bproj_ref[...]
    o_ref[...] = y.astype(o_ref.dtype)


def _pick_batch_block(B, N, max_bb=8):
    """Pick (batches per grid step, number of grid steps).

    Prefer the largest block that (a) divides B (no remainder blocks),
    (b) keeps >= 2 grid steps so both v7x TensorCores get work, and
    (c) keeps the (bb*N, C) row block sublane-aligned (bb*N % 8 == 0).
    Falls back to a single full-array step (always a legal block shape).
    """
    if B <= 1:
        return 1, 1
    for bb in range(min(max_bb, B // 2), 0, -1):
        if B % bb == 0 and (bb * N) % 8 == 0:
            return bb, B // bb
    if N % 8 == 0:
        return 1, B
    return B, 1          # one step, block == full array dims


def prepare_attention_params(params, num_heads):
    """One-time parameter prep: fold softmax scale into W_qkv's q columns and
    store MXU operands in bf16 (no per-forward convert pass)."""
    w_qkv = params["w_qkv"]                                   # (C, 3C), [q | k | v]
    C = w_qkv.shape[0]
    Dh = C // num_heads
    scale = Dh ** (-0.5)
    col_scale = jnp.concatenate([jnp.full((C,), scale, jnp.float32),
                                 jnp.ones((2 * C,), jnp.float32)])
    return {
        "w_qkv": (w_qkv * col_scale[None, :]).astype(jnp.bfloat16),
        "w_proj": params["w_proj"].astype(jnp.bfloat16),
        "b_proj": params["b_proj"].reshape(1, C).astype(jnp.float32),
    }


def attention_forward(x, prep, num_heads):
    """x: (B, N, C) f32, prep from prepare_attention_params ->
    (out (B, N, C) f32, attn (B, H, N, N) f32)."""
    B, N, C = x.shape
    H = num_heads
    Dh = C // H
    bb, steps = _pick_batch_block(B, N)

    x2 = x.reshape(B * N, C)   # contiguous reshape (free); lane-dense rows

    kern = functools.partial(_fused_attention_kernel,
                             bb=bb, seq=N, num_heads=H, head_dim=Dh)

    flops = 2 * B * N * C * (3 * C) + 4 * B * H * N * N * Dh + 2 * B * N * C * C
    bytes_accessed = (B * N * C * 4            # x read
                      + C * 3 * C * 2          # w_qkv (bf16)
                      + C * C * 2              # w_proj (bf16)
                      + C * 4                  # bias
                      + B * N * C * 4          # out write
                      + B * H * N * N * 4)     # attn write

    out2, attn = pl.pallas_call(
        kern,
        out_shape=(
            jax.ShapeDtypeStruct((B * N, C), x.dtype),
            jax.ShapeDtypeStruct((B, H, N, N), jnp.float32),
        ),
        grid=(steps,),
        in_specs=[
            pl.BlockSpec((bb * N, C), lambda g: (g, 0)),       # x rows for this block
            pl.BlockSpec((C, 3 * C), lambda g: (0, 0)),        # W_qkv (resident)
            pl.BlockSpec((C, C), lambda g: (0, 0)),            # W_proj (resident)
            pl.BlockSpec((1, C), lambda g: (0, 0)),            # b_proj
        ],
        out_specs=(
            pl.BlockSpec((bb * N, C), lambda g: (g, 0)),
            pl.BlockSpec((bb, H, N, N), lambda g: (g, 0, 0, 0)),
        ),
        compiler_params=pltpu.CompilerParams(
            dimension_semantics=("parallel",)),
        cost_estimate=pl.CostEstimate(
            flops=flops, transcendentals=B * H * N * N,
            bytes_accessed=bytes_accessed),
    )(x2, prep["w_qkv"], prep["w_proj"], prep["b_proj"])

    # attn_drop / proj_drop are identity (p=0.0 in eval mode)
    return out2.reshape(B, N, C), attn


# ----------------------------------------------------------------------------
# Pure-JAX reference (f32 everywhere) for verification
# ----------------------------------------------------------------------------
def attention_reference(x, params, num_heads):
    B, N, C = x.shape
    Dh = C // num_heads
    scale = Dh ** (-0.5)
    qkv = x @ params["w_qkv"]
    qkv = qkv.reshape(B, N, 3, num_heads, Dh).transpose(2, 0, 3, 1, 4)
    q, k, v = qkv[0], qkv[1], qkv[2]
    s = jnp.einsum("bhqd,bhkd->bhqk", q, k) * scale
    attn = jax.nn.softmax(s, axis=-1)
    out = jnp.einsum("bhqk,bhkd->bhqd", attn, v)
    out = out.transpose(0, 2, 1, 3).reshape(B, N, C)
    out = out @ params["w_proj"] + params["b_proj"]
    return out, attn


# ----------------------------------------------------------------------------
# Main
# ----------------------------------------------------------------------------
if __name__ == "__main__":
    B, N, C, H = 2, 8, 32, 4   # batch, seq, dim, num_heads  (head_dim = 8)

    key = jax.random.PRNGKey(0)
    kx, kq, kp, kb = jax.random.split(key, 4)

    x = jax.random.normal(kx, (B, N, C), dtype=jnp.float32)

    # Parameters stored as (in, out) so kernels compute x @ W directly.
    # qkv_bias=False -> no qkv bias parameter at all.
    params = {
        "w_qkv": 0.02 * jax.random.normal(kq, (C, 3 * C), dtype=jnp.float32),
        "w_proj": 0.02 * jax.random.normal(kp, (C, C), dtype=jnp.float32),
        "b_proj": 0.01 * jax.random.normal(kb, (C,), dtype=jnp.float32),
    }
    prep = prepare_attention_params(params, num_heads=H)

    out, attn = attention_forward(x, prep, num_heads=H)
    out = jax.block_until_ready(out)
    attn = jax.block_until_ready(attn)

    ref_out, ref_attn = attention_reference(x, params, num_heads=H)
    assert out.shape == (B, N, C) and attn.shape == (B, H, N, N)
    # Tolerances loosened because MXU matmuls use bf16 inputs (f32 accumulate);
    # softmax math itself is f32 with exact normalization.
    assert jnp.allclose(out, ref_out, atol=2e-2, rtol=2e-2), (
        float(jnp.max(jnp.abs(out - ref_out))))
    assert jnp.allclose(attn, ref_attn, atol=1e-2, rtol=1e-2), (
        float(jnp.max(jnp.abs(attn - ref_attn))))

    print("KERNEL_OK")
</pallas_src>

<mosaic_0001>
module attributes {stable_mosaic.version = 11 : i64} {
  func.func @_fused_attention_kernel(%arg0: i32, %arg1: memref<8x32xf32, #tpu.memory_space<vmem>>, %arg2: memref<32x96xbf16, #tpu.memory_space<vmem>>, %arg3: memref<32x32xbf16, #tpu.memory_space<vmem>>, %arg4: memref<1x32xf32, #tpu.memory_space<vmem>>, %arg5: memref<8x32xf32, #tpu.memory_space<vmem>>, %arg6: memref<1x4x8x8xf32, #tpu.memory_space<vmem>>) attributes {dimension_semantics = [#tpu.dimension_semantics<parallel>], iteration_bounds = array<i64: 2>, scalar_prefetch = 0 : i64, scratch_operands = 0 : i64, tpu.core_type = #tpu.core_type<tc>, window_params = [{transform_indices = @transform_0, window_bounds = array<i64: 8, 32>}, {pipeline_mode = #tpu.pipeline_mode<synchronous>, transform_indices = @transform_1, window_bounds = array<i64: 32, 96>}, {pipeline_mode = #tpu.pipeline_mode<synchronous>, transform_indices = @transform_2, window_bounds = array<i64: 32, 32>}, {pipeline_mode = #tpu.pipeline_mode<synchronous>, transform_indices = @transform_3, window_bounds = array<i64: 1, 32>}, {transform_indices = @transform_4, window_bounds = array<i64: 8, 32>}, {transform_indices = @transform_5, window_bounds = array<i64: 1, 4, 8, 8>}]} {
    %c0 = arith.constant 0 : index
    %c0_0 = arith.constant 0 : index
    %0 = vector.load %arg1[%c0, %c0_0] : memref<8x32xf32, #tpu.memory_space<vmem>>, vector<8x32xf32>
    %1 = arith.truncf %0 : vector<8x32xf32> to vector<8x32xbf16>
    %c0_1 = arith.constant 0 : index
    %c0_2 = arith.constant 0 : index
    %2 = vector.load %arg2[%c0_1, %c0_2] : memref<32x96xbf16, #tpu.memory_space<vmem>>, vector<32x96xbf16>
    %cst = arith.constant dense<0.000000e+00> : vector<8x96xf32>
    %3 = tpu.matmul %1, %2, %cst {dimension_numbers = #tpu.dot_dimension_numbers<[1], [0], [0], [1], [0, 0, 1, 1], [], []>} : vector<8x32xbf16>, vector<32x96xbf16>, vector<8x96xf32> -> vector<8x96xf32>
    %4 = vector.extract_strided_slice %3 {offsets = [0, 0], sizes = [8, 8], strides = [1, 1]} : vector<8x96xf32> to vector<8x8xf32>
    %5 = arith.truncf %4 : vector<8x8xf32> to vector<8x8xbf16>
    %6 = vector.extract_strided_slice %3 {offsets = [0, 32], sizes = [8, 8], strides = [1, 1]} : vector<8x96xf32> to vector<8x8xf32>
    %7 = arith.truncf %6 : vector<8x8xf32> to vector<8x8xbf16>
    %cst_3 = arith.constant dense<0.000000e+00> : vector<8x8xf32>
    %8 = tpu.matmul %5, %7, %cst_3 {dimension_numbers = #tpu.dot_dimension_numbers<[1], [1], [0], [0], [0, 0, 1, 0], [], []>} : vector<8x8xbf16>, vector<8x8xbf16>, vector<8x8xf32> -> vector<8x8xf32>
    %9 = vector.extract_strided_slice %3 {offsets = [0, 8], sizes = [8, 8], strides = [1, 1]} : vector<8x96xf32> to vector<8x8xf32>
    %10 = arith.truncf %9 : vector<8x8xf32> to vector<8x8xbf16>
    %11 = vector.extract_strided_slice %3 {offsets = [0, 40], sizes = [8, 8], strides = [1, 1]} : vector<8x96xf32> to vector<8x8xf32>
    %12 = arith.truncf %11 : vector<8x8xf32> to vector<8x8xbf16>
    %cst_4 = arith.constant dense<0.000000e+00> : vector<8x8xf32>
    %13 = tpu.matmul %10, %12, %cst_4 {dimension_numbers = #tpu.dot_dimension_numbers<[1], [1], [0], [0], [0, 0, 1, 0], [], []>} : vector<8x8xbf16>, vector<8x8xbf16>, vector<8x8xf32> -> vector<8x8xf32>
    %14 = vector.extract_strided_slice %3 {offsets = [0, 16], sizes = [8, 8], strides = [1, 1]} : vector<8x96xf32> to vector<8x8xf32>
    %15 = arith.truncf %14 : vector<8x8xf32> to vector<8x8xbf16>
    %16 = vector.extract_strided_slice %3 {offsets = [0, 48], sizes = [8, 8], strides = [1, 1]} : vector<8x96xf32> to vector<8x8xf32>
    %17 = arith.truncf %16 : vector<8x8xf32> to vector<8x8xbf16>
    %cst_5 = arith.constant dense<0.000000e+00> : vector<8x8xf32>
    %18 = tpu.matmul %15, %17, %cst_5 {dimension_numbers = #tpu.dot_dimension_numbers<[1], [1], [0], [0], [0, 0, 1, 0], [], []>} : vector<8x8xbf16>, vector<8x8xbf16>, vector<8x8xf32> -> vector<8x8xf32>
    %19 = vector.extract_strided_slice %3 {offsets = [0, 24], sizes = [8, 8], strides = [1, 1]} : vector<8x96xf32> to vector<8x8xf32>
    %20 = arith.truncf %19 : vector<8x8xf32> to vector<8x8xbf16>
    %21 = vector.extract_strided_slice %3 {offsets = [0, 56], sizes = [8, 8], strides = [1, 1]} : vector<8x96xf32> to vector<8x8xf32>
    %22 = arith.truncf %21 : vector<8x8xf32> to vector<8x8xbf16>
    %cst_6 = arith.constant dense<0.000000e+00> : vector<8x8xf32>
    %23 = tpu.matmul %20, %22, %cst_6 {dimension_numbers = #tpu.dot_dimension_numbers<[1], [1], [0], [0], [0, 0, 1, 0], [], []>} : vector<8x8xbf16>, vector<8x8xbf16>, vector<8x8xf32> -> vector<8x8xf32>
    %24 = vector.shape_cast %8 : vector<8x8xf32> to vector<1x8x8xf32>
    %25 = vector.shape_cast %13 : vector<8x8xf32> to vector<1x8x8xf32>
    %26 = vector.shape_cast %18 : vector<8x8xf32> to vector<1x8x8xf32>
    %27 = vector.shape_cast %23 : vector<8x8xf32> to vector<1x8x8xf32>
    %28 = tpu.concatenate %24, %25, %26, %27 in 0 : vector<1x8x8xf32>, vector<1x8x8xf32>, vector<1x8x8xf32>, vector<1x8x8xf32> -> vector<4x8x8xf32>
    %cst_7 = arith.constant dense<0xFF800000> : vector<4x8xf32>
    %29 = vector.multi_reduction <maximumf>, %28, %cst_7 [2] : vector<4x8x8xf32> to vector<4x8xf32>
    %30 = vector.shape_cast %29 : vector<4x8xf32> to vector<4x8x1xf32>
    %31 = vector.broadcast %30 : vector<4x8x1xf32> to vector<4x8x8xf32>
    %32 = arith.subf %28, %31 : vector<4x8x8xf32>
    %33 = math.exp %32 : vector<4x8x8xf32>
    %cst_8 = arith.constant dense<0.000000e+00> : vector<4x8xf32>
    %34 = vector.multi_reduction <add>, %33, %cst_8 [2] : vector<4x8x8xf32> to vector<4x8xf32>
    %35 = vector.shape_cast %34 : vector<4x8xf32> to vector<4x8x1xf32>
    %36 = vector.broadcast %35 : vector<4x8x1xf32> to vector<4x8x8xf32>
    %37 = arith.divf %33, %36 : vector<4x8x8xf32>
    %c0_9 = arith.constant 0 : index
    %c0_10 = arith.constant 0 : index
    %c0_11 = arith.constant 0 : index
    %c0_12 = arith.constant 0 : index
    %38 = vector.load %arg6[%c0_9, %c0_10, %c0_11, %c0_12] : memref<1x4x8x8xf32, #tpu.memory_space<vmem>>, vector<1x4x8x8xf32>
    %39 = vector.shape_cast %38 : vector<1x4x8x8xf32> to vector<4x8x8xf32>
    %40 = vector.shape_cast %37 : vector<4x8x8xf32> to vector<1x4x8x8xf32>
    tpu.vector_store %arg6[%c0_9, %c0_10, %c0_11, %c0_12], %40 {strides = array<i32>} : memref<1x4x8x8xf32, #tpu.memory_space<vmem>>, vector<1x4x8x8xf32>,
    %41 = vector.extract_strided_slice %3 {offsets = [0, 64], sizes = [8, 8], strides = [1, 1]} : vector<8x96xf32> to vector<8x8xf32>
    %42 = arith.truncf %41 : vector<8x8xf32> to vector<8x8xbf16>
    %43 = vector.extract_strided_slice %37 {offsets = [0, 0, 0], sizes = [1, 8, 8], strides = [1, 1, 1]} : vector<4x8x8xf32> to vector<1x8x8xf32>
    %44 = vector.shape_cast %43 : vector<1x8x8xf32> to vector<8x8xf32>
    %45 = arith.truncf %44 : vector<8x8xf32> to vector<8x8xbf16>
    %cst_13 = arith.constant dense<0.000000e+00> : vector<8x8xf32>
    %46 = tpu.matmul %45, %42, %cst_13 {dimension_numbers = #tpu.dot_dimension_numbers<[1], [0], [0], [1], [0, 0, 1, 1], [], []>} : vector<8x8xbf16>, vector<8x8xbf16>, vector<8x8xf32> -> vector<8x8xf32>
    %47 = vector.extract_strided_slice %3 {offsets = [0, 72], sizes = [8, 8], strides = [1, 1]} : vector<8x96xf32> to vector<8x8xf32>
    %48 = arith.truncf %47 : vector<8x8xf32> to vector<8x8xbf16>
    %49 = vector.extract_strided_slice %37 {offsets = [1, 0, 0], sizes = [1, 8, 8], strides = [1, 1, 1]} : vector<4x8x8xf32> to vector<1x8x8xf32>
    %50 = vector.shape_cast %49 : vector<1x8x8xf32> to vector<8x8xf32>
    %51 = arith.truncf %50 : vector<8x8xf32> to vector<8x8xbf16>
    %cst_14 = arith.constant dense<0.000000e+00> : vector<8x8xf32>
    %52 = tpu.matmul %51, %48, %cst_14 {dimension_numbers = #tpu.dot_dimension_numbers<[1], [0], [0], [1], [0, 0, 1, 1], [], []>} : vector<8x8xbf16>, vector<8x8xbf16>, vector<8x8xf32> -> vector<8x8xf32>
    %53 = vector.extract_strided_slice %3 {offsets = [0, 80], sizes = [8, 8], strides = [1, 1]} : vector<8x96xf32> to vector<8x8xf32>
    %54 = arith.truncf %53 : vector<8x8xf32> to vector<8x8xbf16>
    %55 = vector.extract_strided_slice %37 {offsets = [2, 0, 0], sizes = [1, 8, 8], strides = [1, 1, 1]} : vector<4x8x8xf32> to vector<1x8x8xf32>
    %56 = vector.shape_cast %55 : vector<1x8x8xf32> to vector<8x8xf32>
    %57 = arith.truncf %56 : vector<8x8xf32> to vector<8x8xbf16>
    %cst_15 = arith.constant dense<0.000000e+00> : vector<8x8xf32>
    %58 = tpu.matmul %57, %54, %cst_15 {dimension_numbers = #tpu.dot_dimension_numbers<[1], [0], [0], [1], [0, 0, 1, 1], [], []>} : vector<8x8xbf16>, vector<8x8xbf16>, vector<8x8xf32> -> vector<8x8xf32>
    %59 = vector.extract_strided_slice %3 {offsets = [0, 88], sizes = [8, 8], strides = [1, 1]} : vector<8x96xf32> to vector<8x8xf32>
    %60 = arith.truncf %59 : vector<8x8xf32> to vector<8x8xbf16>
    %61 = vector.extract_strided_slice %37 {offsets = [3, 0, 0], sizes = [1, 8, 8], strides = [1, 1, 1]} : vector<4x8x8xf32> to vector<1x8x8xf32>
    %62 = vector.shape_cast %61 : vector<1x8x8xf32> to vector<8x8xf32>
    %63 = arith.truncf %62 : vector<8x8xf32> to vector<8x8xbf16>
    %cst_16 = arith.constant dense<0.000000e+00> : vector<8x8xf32>
    %64 = tpu.matmul %63, %60, %cst_16 {dimension_numbers = #tpu.dot_dimension_numbers<[1], [0], [0], [1], [0, 0, 1, 1], [], []>} : vector<8x8xbf16>, vector<8x8xbf16>, vector<8x8xf32> -> vector<8x8xf32>
    %65 = tpu.concatenate %46, %52, %58, %64 in 1 : vector<8x8xf32>, vector<8x8xf32>, vector<8x8xf32>, vector<8x8xf32> -> vector<8x32xf32>
    %66 = arith.truncf %65 : vector<8x32xf32> to vector<8x32xbf16>
    %c0_17 = arith.constant 0 : index
    %c0_18 = arith.constant 0 : index
    %67 = vector.load %arg3[%c0_17, %c0_18] : memref<32x32xbf16, #tpu.memory_space<vmem>>, vector<32x32xbf16>
    %cst_19 = arith.constant dense<0.000000e+00> : vector<8x32xf32>
    %68 = tpu.matmul %66, %67, %cst_19 {dimension_numbers = #tpu.dot_dimension_numbers<[1], [0], [0], [1], [0, 0, 1, 1], [], []>} : vector<8x32xbf16>, vector<32x32xbf16>, vector<8x32xf32> -> vector<8x32xf32>
    %c0_20 = arith.constant 0 : index
    %c0_21 = arith.constant 0 : index
    %69 = vector.load %arg4[%c0_20, %c0_21] : memref<1x32xf32, #tpu.memory_space<vmem>>, vector<1x32xf32>
    %70 = vector.broadcast %69 : vector<1x32xf32> to vector<8x32xf32>
    %71 = arith.addf %68, %70 : vector<8x32xf32>
    %c0_22 = arith.constant 0 : index
    %c0_23 = arith.constant 0 : index
    %72 = vector.load %arg5[%c0_22, %c0_23] : memref<8x32xf32, #tpu.memory_space<vmem>>, vector<8x32xf32>
    tpu.vector_store %arg5[%c0_22, %c0_23], %71 {strides = array<i32>} : memref<8x32xf32, #tpu.memory_space<vmem>>, vector<8x32xf32>,
    return
  }
  func.func @transform_0(%arg0: i32) -> (i32, i32) {
    %c0_i32 = arith.constant 0 : i32
    %c0_i32_0 = arith.constant 0 : i32
    return %arg0, %c0_i32 : i32, i32
  }
  func.func @transform_1(%arg0: i32) -> (i32, i32) {
    %c0_i32 = arith.constant 0 : i32
    %c0_i32_0 = arith.constant 0 : i32
    %c0_i32_1 = arith.constant 0 : i32
    return %c0_i32, %c0_i32_0 : i32, i32
  }
  func.func @transform_2(%arg0: i32) -> (i32, i32) {
    %c0_i32 = arith.constant 0 : i32
    %c0_i32_0 = arith.constant 0 : i32
    %c0_i32_1 = arith.constant 0 : i32
    return %c0_i32, %c0_i32_0 : i32, i32
  }
  func.func @transform_3(%arg0: i32) -> (i32, i32) {
    %c0_i32 = arith.constant 0 : i32
    %c0_i32_0 = arith.constant 0 : i32
    %c0_i32_1 = arith.constant 0 : i32
    return %c0_i32, %c0_i32_0 : i32, i32
  }
  func.func @transform_4(%arg0: i32) -> (i32, i32) {
    %c0_i32 = arith.constant 0 : i32
    %c0_i32_0 = arith.constant 0 : i32
    return %arg0, %c0_i32 : i32, i32
  }
  func.func @transform_5(%arg0: i32) -> (i32, i32, i32, i32) {
    %c0_i32 = arith.constant 0 : i32
    %c0_i32_0 = arith.constant 0 : i32
    %c0_i32_1 = arith.constant 0 : i32
    %c0_i32_2 = arith.constant 0 : i32
    return %arg0, %c0_i32, %c0_i32_0, %c0_i32_1 : i32, i32, i32, i32
  }
}

</mosaic_0001>

<llo_original>
// kernel: tpu_custom_call.1
$region0: #{tpu_custom_call.1}
  #allocation0 [shape = 'u32[]', space=smem, size = 0x4, offset = 0x4, fixed_abs, tag = 'smem constant byte address 0x4 - core index']
  #allocation1 [shape = 'u32[72,128]{1,0:T(1,128)}', space=vmem, size = 0x9000, scoped, tag = 'internal scratch']
  %s0 = inlined_call_operand.hbm [shape: f32[16,32], index: 0, kind: input, shape index: {}]
  %s1 = inlined_call_operand.hbm [shape: bf16[32,96], index: 1, kind: input, shape index: {}]
  %s2 = inlined_call_operand.hbm [shape: bf16[32,32], index: 2, kind: input, shape index: {}]
  %s3 = inlined_call_operand.vmem [shape: f32[1,32], index: 3, kind: input, shape index: {}]
  %s4 = inlined_call_operand.hbm [shape: f32[16,32], index: 4, kind: output, shape index: {0}]
  %s5 = inlined_call_operand.hbm [shape: f32[2,4,8,8], index: 5, kind: output, shape index: {1}]
  %6 = xla_tuple %s4, %s5
  %s7 = sld [smem:[#allocation0]]
  $region69: #{tpu_custom_call.1} parent=0
    _
  %s9 = ssub.s32 1, %s7
  %s10 = scalar_select 0, %s9, %s7
  $region1: #{tpu_custom_call.1} parent=0
    #allocation2 [shape = 'u8[8192]{0}', space=vmem, size = 0x2000, scoped, tag = 'input window, operand 0']
    #allocation3 [shape = 's32[2]{0}', space=sflag, size = 0x8, scoped, tag = 'scoped memory for tpu_custom_call.1']
    #allocation4 [shape = 's32[2]{0}', space=sflag, size = 0x8, scoped, tag = 'scoped memory for tpu_custom_call.1']
    #allocation5 [shape = 'u8[8192]{0}', space=vmem, size = 0x2000, scoped, tag = 'input window, operand 1, single buffered']
    #allocation6 [shape = 's32[1]{0}', space=sflag, size = 0x4, scoped, tag = 'scoped memory for tpu_custom_call.1']
    #allocation7 [shape = 'u8[8192]{0}', space=vmem, size = 0x2000, scoped, tag = 'input window, operand 2, single buffered']
    #allocation8 [shape = 'u8[8192]{0}', space=vmem, size = 0x2000, scoped, tag = 'output window, operand 0']
    #allocation9 [shape = 'u8[32768]{0}', space=vmem, size = 0x8000, scoped, tag = 'output window, operand 1']
    #allocation10 [shape = 's32[2]{0}', space=sflag, size = 0x8, scoped, tag = 'scoped memory for tpu_custom_call.1']
    %11 = vsyncpa [#allocation3], 0
    %s12 = scalar_lea.sflag [#allocation3], 1
    %13 = vsyncpa %s12, 0
    %14 = vsyncpa [#allocation6], 0
    %15 = vsyncpa [#allocation4], 0
    %s16 = scalar_lea.sflag [#allocation4], 1
    %17 = vsyncpa %s16, 0
    %18 = vsyncpa [#allocation10], 0
    %s19 = scalar_lea.sflag [#allocation10], 1
    %20 = vsyncpa %s19, 0
    loop: start=0, step=1, limit=4
    $region2: #{tpu_custom_call.1} parent=1 // loop_pre_header
      _
    $region3: #{tpu_custom_call.1} parent=1 // loop_header
      %s22 = sphi 0, %s26
      %p23 = scmp.ge.s32.totalorder %s22, 4
      %s32 = sphi 0, %s34
      %s35 = sphi 0, %s32
      %s36 = sphi 0, %s35
      %s52 = sphi 0, %s36
      %s56 = sphi 0, %s56
      %s58 = sphi 0, %s56
      %s59 = sphi 0, %s58
      %s73 = sphi 0, %s59
      %s77 = sphi 0, %s77
      %s79 = sphi 0, %s77
      %s80 = sphi 0, %s79
      %s94 = sphi 0, %s80
      %s98 = sphi 0, %s98
      %s100 = sphi 0, %s98
      %s101 = sphi 0, %s100
      %s115 = sphi 0, %s101
      %s121 = sphi 0, %s123
      %s124 = sphi 0, %s121
      %s125 = sphi 0, %s124
      %s141 = sphi 0, %s125
      %s147 = sphi 0, %s149
      %s150 = sphi 0, %s147
      %s151 = sphi 0, %s150
      %s167 = sphi 0, %s151
    $region4: #{tpu_custom_call.1} parent=1 // loop_header_branch
      %25 = sbr.rel (%p23) target = $region8
    $region5: #{tpu_custom_call.1} parent=1 // loop_body
      %s27 = ssub.s32 %s22, 1
      %s28 = ssub.s32 %s22, 2
      %s29 = sadd.s32 %s22, 1
      %s30 = ssub.s32 %s22, %s29
      %p31 = scmp.eq.s32.totalorder %s30, 0
      %s33 = sadd.s32 %s32, 1
      %s34 = scalar_select %p31, %s32, %s33
      %p37 = pneg %p31
      %p38 = scmp.eq.s32.totalorder %s22, 1
      %p39 = por %p37, %p38
      %p40 = scmp.ne.s32.totalorder %s32, %s35
      %p41 = scmp.eq.s32.totalorder %s22, 0
      %p42 = por %p40, %p41
      %p43 = scmp.ne.s32.totalorder %s32, %s35
      %p44 = scmp.eq.s32.totalorder %s27, 1
      %p45 = por %p43, %p44
      %p46 = scmp.ne.s32.totalorder %s35, %s36
      %p47 = scmp.eq.s32.totalorder %s27, 0
      %p48 = por %p46, %p47
      %p49 = scmp.ne.s32.totalorder %s35, %s36
      %p50 = scmp.eq.s32.totalorder %s28, 1
      %p51 = por %p49, %p50
      %p53 = scmp.ne.s32.totalorder %s36, %s52
      %p54 = scmp.eq.s32.totalorder %s28, 0
      %p55 = por %p53, %p54
      %s57 = sadd.s32 %s56, 1
      %p60 = scmp.eq.s32.totalorder %s22, 1
      %p61 = scmp.ne.s32.totalorder %s56, %s58
      %p62 = scmp.eq.s32.totalorder %s22, 0
      %p63 = por %p61, %p62
      %p64 = scmp.ne.s32.totalorder %s56, %s58
      %p65 = scmp.eq.s32.totalorder %s27, 1
      %p66 = por %p64, %p65
      %p67 = scmp.ne.s32.totalorder %s58, %s59
      %p68 = scmp.eq.s32.totalorder %s27, 0
      %p69 = por %p67, %p68
      %p70 = scmp.ne.s32.totalorder %s58, %s59
      %p71 = scmp.eq.s32.totalorder %s28, 1
      %p72 = por %p70, %p71
      %p74 = scmp.ne.s32.totalorder %s59, %s73
      %p75 = scmp.eq.s32.totalorder %s28, 0
      %p76 = por %p74, %p75
      %s78 = sadd.s32 %s77, 1
      %p81 = scmp.eq.s32.totalorder %s22, 1
      %p82 = scmp.ne.s32.totalorder %s77, %s79
      %p83 = scmp.eq.s32.totalorder %s22, 0
      %p84 = por %p82, %p83
      %p85 = scmp.ne.s32.totalorder %s77, %s79
      %p86 = scmp.eq.s32.totalorder %s27, 1
      %p87 = por %p85, %p86
      %p88 = scmp.ne.s32.totalorder %s79, %s80
      %p89 = scmp.eq.s32.totalorder %s27, 0
      %p90 = por %p88, %p89
      %p91 = scmp.ne.s32.totalorder %s79, %s80
      %p92 = scmp.eq.s32.totalorder %s28, 1
      %p93 = por %p91, %p92
      %p95 = scmp.ne.s32.totalorder %s80, %s94
      %p96 = scmp.eq.s32.totalorder %s28, 0
      %p97 = por %p95, %p96
      %s99 = sadd.s32 %s98, 1
      %p102 = scmp.eq.s32.totalorder %s22, 1
      %p103 = scmp.ne.s32.totalorder %s98, %s100
      %p104 = scmp.eq.s32.totalorder %s22, 0
      %p105 = por %p103, %p104
      %p106 = scmp.ne.s32.totalorder %s98, %s100
      %p107 = scmp.eq.s32.totalorder %s27, 1
      %p108 = por %p106, %p107
      %p109 = scmp.ne.s32.totalorder %s100, %s101
      %p110 = scmp.eq.s32.totalorder %s27, 0
      %p111 = por %p109, %p110
      %p112 = scmp.ne.s32.totalorder %s100, %s101
      %p113 = scmp.eq.s32.totalorder %s28, 1
      %p114 = por %p112, %p113
      %p116 = scmp.ne.s32.totalorder %s101, %s115
      %p117 = scmp.eq.s32.totalorder %s28, 0
      %p118 = por %p116, %p117
      %s119 = ssub.s32 %s22, %s29
      %p120 = scmp.eq.s32.totalorder %s119, 0
      %s122 = sadd.s32 %s121, 1
      %s123 = scalar_select %p120, %s121, %s122
      %p126 = pneg %p120
      %p127 = scmp.eq.s32.totalorder %s22, 1
      %p128 = por %p126, %p127
      %p129 = scmp.ne.s32.totalorder %s121, %s124
      %p130 = scmp.eq.s32.totalorder %s22, 0
      %p131 = por %p129, %p130
      %p132 = scmp.ne.s32.totalorder %s121, %s124
      %p133 = scmp.eq.s32.totalorder %s27, 1
      %p134 = por %p132, %p133
      %p135 = scmp.ne.s32.totalorder %s124, %s125
      %p136 = scmp.eq.s32.totalorder %s27, 0
      %p137 = por %p135, %p136
      %p138 = scmp.ne.s32.totalorder %s124, %s125
      %p139 = scmp.eq.s32.totalorder %s28, 1
      %p140 = por %p138, %p139
      %p142 = scmp.ne.s32.totalorder %s125, %s141
      %p143 = scmp.eq.s32.totalorder %s28, 0
      %p144 = por %p142, %p143
      %s145 = ssub.s32 %s22, %s29
      %p146 = scmp.eq.s32.totalorder %s145, 0
      %s148 = sadd.s32 %s147, 1
      %s149 = scalar_select %p146, %s147, %s148
      %p152 = pneg %p146
      %p153 = scmp.eq.s32.totalorder %s22, 1
      %p154 = por %p152, %p153
      %p155 = scmp.ne.s32.totalorder %s147, %s150
      %p156 = scmp.eq.s32.totalorder %s22, 0
      %p157 = por %p155, %p156
      %p158 = scmp.ne.s32.totalorder %s147, %s150
      %p159 = scmp.eq.s32.totalorder %s27, 1
      %p160 = por %p158, %p159
      %p161 = scmp.ne.s32.totalorder %s150, %s151
      %p162 = scmp.eq.s32.totalorder %s27, 0
      %p163 = por %p161, %p162
      %p164 = scmp.ne.s32.totalorder %s150, %s151
      %p165 = scmp.eq.s32.totalorder %s28, 1
      %p166 = por %p164, %p165
      %p168 = scmp.ne.s32.totalorder %s151, %s167
      %p169 = scmp.eq.s32.totalorder %s28, 0
      %p170 = por %p168, %p169
      %p171 = scmp.le.s32.totalorder 1, %s22
      %p172 = scmp.lt.s32.totalorder %s22, 3
      %p173 = pnand %p171, %p172
      %p174 = pneg %p173
      // Predicated region
      $region9: #{tpu_custom_call.1} parent=5 // pred_check
        _
      $region10: #{tpu_custom_call.1} parent=5 // pred_check_branch
        %176 = sbr.rel (%p173) target = $region12
      $region11: #{tpu_custom_call.1} parent=5 // pred_region
        %s177 = ssub.s32 %s22, 1
        // Predicated region
        $region13: #{tpu_custom_call.1} parent=11 // pred_check
          %p178 = pneg %p69
        $region14: #{tpu_custom_call.1} parent=11 // pred_check_branch
          %180 = sbr.rel (%p178) target = $region16
        $region15: #{tpu_custom_call.1} parent=11 // pred_region
          %182 = vsyncadd [#allocation6], 0
          %s183 = sshll.u32 %s1, 4
          %s184 = int_to_ptr.hbm [resolvable:$true] %s183
          %s185 = sshll.u32 [#allocation5], 4
          %s186 = int_to_ptr.vmem [resolvable:$true] %s185
          %191 = dma.hbm_to_vmem [thread:$0]  %s184, 256, %s186, [#allocation6], 64, 64, 4
        $region16: #{tpu_custom_call.1} parent=11 // pred_fallthru
          _
        // Predicated region
        $region17: #{tpu_custom_call.1} parent=11 // pred_check
          %p192 = pneg %p90
        $region18: #{tpu_custom_call.1} parent=11 // pred_check_branch
          %194 = sbr.rel (%p192) target = $region20
        $region19: #{tpu_custom_call.1} parent=11 // pred_region
          %196 = vsyncadd [#allocation6], 0
          %s197 = sshll.u32 %s2, 4
          %s198 = int_to_ptr.hbm [resolvable:$true] %s197
          %s199 = sshll.u32 [#allocation7], 4
          %s200 = int_to_ptr.vmem [resolvable:$true] %s199
          %205 = dma.hbm_to_vmem [thread:$0]  %s198, 256, %s200, [#allocation6], 64, 64, 4
        $region20: #{tpu_custom_call.1} parent=11 // pred_fallthru
          _
        // Predicated region
        $region21: #{tpu_custom_call.1} parent=11 // pred_check
          %p206 = pneg %p111
        $region22: #{tpu_custom_call.1} parent=11 // pred_check_branch
          %208 = sbr.rel (%p206) target = $region24
        $region23: #{tpu_custom_call.1} parent=11 // pred_region
          _
        $region24: #{tpu_custom_call.1} parent=11 // pred_fallthru
          _
      $region12: #{tpu_custom_call.1} parent=5 // pred_fallthru
        _
      %p209 = scmp.lt.s32.totalorder %s22, 2
      // Predicated region
      $region25: #{tpu_custom_call.1} parent=5 // pred_check
        %p210 = pneg %p209
      $region26: #{tpu_custom_call.1} parent=5 // pred_check_branch
        %212 = sbr.rel (%p210) target = $region28
      $region27: #{tpu_custom_call.1} parent=5 // pred_region
        // Predicated region
        $region29: #{tpu_custom_call.1} parent=27 // pred_check
          %p213 = pneg %p42
        $region30: #{tpu_custom_call.1} parent=27 // pred_check_branch
          %215 = sbr.rel (%p213) target = $region32
        $region31: #{tpu_custom_call.1} parent=27 // pred_region
          %s216 = sand.u32 %s32, 1
          %s217 = scalar_lea.sflag [#allocation3], %s216
          %s218 = sand.u32 %s32, 1
          %s219 = smul.addr %s218, 8
          %s220 = scalar_lea.vmem [#allocation2], %s219
          %222 = vsyncadd %s217, 0
          %s223 = smul.addr %s22, 8
          %s224 = scalar_lea.hbm %s0, %s223
          %s226 = sshll.u32 %s224, 4
          %s227 = int_to_ptr.hbm [resolvable:$true] %s226
          %s228 = sshll.u32 %s220, 4
          %s229 = int_to_ptr.vmem [resolvable:$true] %s228
          %231 = dma.hbm_to_vmem [thread:$0]  %s227, 128, %s229, %s217
        $region32: #{tpu_custom_call.1} parent=27 // pred_fallthru
          _
      $region28: #{tpu_custom_call.1} parent=5 // pred_fallthru
        _
      %p232 = scmp.le.s32.totalorder 1, %s22
      %p233 = scmp.lt.s32.totalorder %s22, 3
      %p234 = pnand %p232, %p233
      %p235 = pneg %p234
      // Predicated region
      $region33: #{tpu_custom_call.1} parent=5 // pred_check
        _
      $region34: #{tpu_custom_call.1} parent=5 // pred_check_branch
        %237 = sbr.rel (%p234) target = $region36
      $region35: #{tpu_custom_call.1} parent=5 // pred_region
        %s238 = ssub.s32 %s22, 1
        %s239 = sand.u32 %s35, 1
        %s240 = scalar_lea.sflag [#allocation3], %s239
        %s241 = sand.u32 %s35, 1
        %s242 = smul.addr %s241, 8
        %s243 = scalar_lea.vmem [#allocation2], %s242
        // Predicated region
        $region37: #{tpu_custom_call.1} parent=35 // pred_check
          %p244 = pneg %p48
        $region38: #{tpu_custom_call.1} parent=35 // pred_check_branch
          %246 = sbr.rel (%p244) target = $region40
        $region39: #{tpu_custom_call.1} parent=35 // pred_region
          %248 = dma.done %s240, 128
        $region40: #{tpu_custom_call.1} parent=35 // pred_fallthru
          _
        // Predicated region
        $region41: #{tpu_custom_call.1} parent=35 // pred_check
          %p249 = pneg %p69
        $region42: #{tpu_custom_call.1} parent=35 // pred_check_branch
          %251 = sbr.rel (%p249) target = $region44
        $region43: #{tpu_custom_call.1} parent=35 // pred_region
          %253 = dma.done [#allocation6], 256
        $region44: #{tpu_custom_call.1} parent=35 // pred_fallthru
          _
        // Predicated region
        $region45: #{tpu_custom_call.1} parent=35 // pred_check
          %p254 = pneg %p90
        $region46: #{tpu_custom_call.1} parent=35 // pred_check_branch
          %256 = sbr.rel (%p254) target = $region48
        $region47: #{tpu_custom_call.1} parent=35 // pred_region
          %258 = dma.done [#allocation6], 256
        $region48: #{tpu_custom_call.1} parent=35 // pred_fallthru
          _
        %s259 = sand.u32 %s35, 1
        %s260 = scalar_lea.sflag [#allocation3], %s259
        %s261 = sand.u32 %s35, 1
        %s262 = smul.addr %s261, 8
        %s263 = scalar_lea.vmem [#allocation2], %s262
        %p264 = pneg %p48
        %p265 = pneg %p45
        %p266 = pneg %p69
        %p267 = pneg %p66
        %p268 = pneg %p90
        %p269 = pneg %p87
        %p270 = pneg %p111
        %p271 = pneg %p108
        %p272 = pneg %p137
        %p273 = pneg %p134
        %s274 = sand.u32 %s124, 1
        %s275 = scalar_lea.sflag [#allocation4], %s274
        %s276 = sand.u32 %s124, 1
        %s277 = smul.addr %s276, 8
        %s278 = scalar_lea.vmem [#allocation8], %s277
        %p279 = pneg %p163
        %p280 = pneg %p160
        %s281 = sand.u32 %s150, 1
        %s282 = scalar_lea.sflag [#allocation10], %s281
        %s283 = sand.u32 %s150, 1
        %s284 = smul.addr %s283, 32
        %s285 = scalar_lea.vmem [#allocation9], %s284
        %v287 = vld [vmem:[%s243] sm:$0xff]
        %v288 = vpack.c.bf16 %v287, %v287
        %v289 = vld [vmem:[#allocation5] sm:$0xf]
        %v290 = vld [vmem:[#allocation5 + $0x4] sm:$0xf]
        %v291 = vld [vmem:[#allocation5 + $0x8] sm:$0xf]
        %v292 = vld [vmem:[#allocation5 + $0xc] sm:$0xf]
        %v297 = vunpack.c.l.b16 %v289
        %v298 = vunpack.c.l.b16 %v290
        %v299 = vunpack.c.l.b16 %v291
        %v300 = vunpack.c.l.b16 %v292
        %v301 = vpack.c.b16 %v298, %v297
        %v302 = vpack.c.b16 %v300, %v299
        %vm305 = vcmask 261120
        %v307 = vsel %vm305, %v288, 0
        %309 = vmatpush.bf16.msra.mxu0 0
        %310 = vmatpush.bf16.msra.mxu0 0
        %311 = vmatpush.bf16.msra.mxu0 0
        %312 = vmatpush.bf16.msra.mxu0 0
        %313 = vmatpush.bf16.msra.mxu0 0
        %314 = vmatpush.bf16.msra.mxu0 0
        %315 = vmatpush.bf16.msra.mxu0 %v302
        %316 = vmatpush.bf16.msra.mxu0 %v301
        %317 = vmatmul.bf16.gmra.mxu0 %v307
        %v318 = vpop.f32.mrf.mxu0
        %v319 = vadd.f32 0.0, %v318
        %v320 = vpop.f32.mrf.mxu0
        %321 = vdwg.mxu0
        %v322 = vpack.c.bf16 %v319, %v319
        %324 = vrot.lane.b32.xlu0 %v322, 96
        %v325 = vpop.permute.xlu0 %324
        %vm326 = vcmask 64512
        %v328 = vsel %vm326, %v322, 0
        %v331 = vsel %vm326, %v325, 0
        %333 = vmatpush.bf16.xpose.msra.mxu0 0
        %334 = vmatpush.bf16.xpose.msra.mxu0 0
        %335 = vmatpush.bf16.xpose.msra.mxu0 0
        %336 = vmatpush.bf16.xpose.msra.mxu0 0
        %337 = vmatpush.bf16.xpose.msra.mxu0 0
        %338 = vmatpush.bf16.xpose.msra.mxu0 0
        %339 = vmatpush.bf16.xpose.msra.mxu0 0
        %340 = vmatpush.bf16.xpose.msra.mxu0 %v331
        %341 = vmatmul.bf16.gmra.mxu0 %v328
        %v342 = vpop.f32.mrf.mxu0
        %v343 = vadd.f32 0.0, %v342
        %v344 = vpop.f32.mrf.mxu0
        %345 = vdwg.mxu0
        %346 = vrot.lane.b32.xlu0 %v322, 120
        %v347 = vpop.permute.xlu0 %346
        %348 = vrot.lane.b32.xlu0 %v322, 88
        %v349 = vpop.permute.xlu0 %348
        %v351 = vsel %vm326, %v347, 0
        %v354 = vsel %vm326, %v349, 0
        %356 = vmatpush.bf16.xpose.msra.mxu0 0
        %357 = vmatpush.bf16.xpose.msra.mxu0 0
        %358 = vmatpush.bf16.xpose.msra.mxu0 0
        %359 = vmatpush.bf16.xpose.msra.mxu0 0
        %360 = vmatpush.bf16.xpose.msra.mxu0 0
        %361 = vmatpush.bf16.xpose.msra.mxu0 0
        %362 = vmatpush.bf16.xpose.msra.mxu0 0
        %363 = vmatpush.bf16.xpose.msra.mxu0 %v354
        %364 = vmatmul.bf16.gmra.mxu0 %v351
        %v365 = vpop.f32.mrf.mxu0
        %v366 = vadd.f32 0.0, %v365
        %v367 = vpop.f32.mrf.mxu0
        %368 = vdwg.mxu0
        %369 = vrot.lane.b32.xlu0 %v322, 112
        %v370 = vpop.permute.xlu0 %369
        %371 = vrot.lane.b32.xlu0 %v322, 80
        %v372 = vpop.permute.xlu0 %371
        %v374 = vsel %vm326, %v370, 0
        %v377 = vsel %vm326, %v372, 0
        %379 = vmatpush.bf16.xpose.msra.mxu0 0
        %380 = vmatpush.bf16.xpose.msra.mxu0 0
        %381 = vmatpush.bf16.xpose.msra.mxu0 0
        %382 = vmatpush.bf16.xpose.msra.mxu0 0
        %383 = vmatpush.bf16.xpose.msra.mxu0 0
        %384 = vmatpush.bf16.xpose.msra.mxu0 0
        %385 = vmatpush.bf16.xpose.msra.mxu0 0
        %386 = vmatpush.bf16.xpose.msra.mxu0 %v377
        %387 = vmatmul.bf16.gmra.mxu0 %v374
        %v388 = vpop.f32.mrf.mxu0
        %v389 = vadd.f32 0.0, %v388
        %v390 = vpop.f32.mrf.mxu0
        %391 = vdwg.mxu0
        %392 = vrot.lane.b32.xlu0 %v322, 104
        %v393 = vpop.permute.xlu0 %392
        %394 = vrot.lane.b32.xlu0 %v322, 72
        %v395 = vpop.permute.xlu0 %394
        %v397 = vsel %vm326, %v393, 0
        %v400 = vsel %vm326, %v395, 0
        %402 = vmatpush.bf16.xpose.msra.mxu0 0
        %403 = vmatpush.bf16.xpose.msra.mxu0 0
        %404 = vmatpush.bf16.xpose.msra.mxu0 0
        %405 = vmatpush.bf16.xpose.msra.mxu0 0
        %406 = vmatpush.bf16.xpose.msra.mxu0 0
        %407 = vmatpush.bf16.xpose.msra.mxu0 0
        %408 = vmatpush.bf16.xpose.msra.mxu0 0
        %409 = vmatpush.bf16.xpose.msra.mxu0 %v400
        %410 = vmatmul.bf16.gmra.mxu0 %v397
        %v411 = vpop.f32.mrf.mxu0
        %v412 = vadd.f32 0.0, %v411
        %v413 = vpop.f32.mrf.mxu0
        %414 = vdwg.mxu0
        %v415 = vsel %vm326, %v343, -inf
        %416 = vmax.xlane.f32.xlu0 %v415
        %v417 = vpop.xlane.xlu0 %416
        %v418 = vsel %vm326, %v366, -inf
        %419 = vmax.xlane.f32.xlu0 %v418
        %v420 = vpop.xlane.xlu0 %419
        %v421 = vsel %vm326, %v389, -inf
        %422 = vmax.xlane.f32.xlu0 %v421
        %v423 = vpop.xlane.xlu0 %422
        %v424 = vsel %vm326, %v412, -inf
        %425 = vmax.xlane.f32.xlu0 %v424
        %v426 = vpop.xlane.xlu0 %425
        %v427 = vsub.f32 %v343, %v417
        %v428 = vsub.f32 %v366, %v420
        %v429 = vsub.f32 %v389, %v423
        %v430 = vsub.f32 %v412, %v426
        %v431 = vmul.f32 %v427, 1.442695
        %v432 = vpow.pop %v431
        %v433 = vmul.f32 %v428, 1.442695
        %v434 = vpow.pop %v433
        %v435 = vmul.f32 %v429, 1.442695
        %v436 = vpow.pop %v435
        %v437 = vmul.f32 %v430, 1.442695
        %v438 = vpow.pop %v437
        %v439 = vsel %vm326, %v432, 0.0
        %440 = vadd.xlane.f32.xlu0 %v439
        %v441 = vpop.xlane.xlu0 %440
        %v442 = vsel %vm326, %v434, 0.0
        %443 = vadd.xlane.f32.xlu0 %v442
        %v444 = vpop.xlane.xlu0 %443
        %v445 = vsel %vm326, %v436, 0.0
        %446 = vadd.xlane.f32.xlu0 %v445
        %v447 = vpop.xlane.xlu0 %446
        %v448 = vsel %vm326, %v438, 0.0
        %449 = vadd.xlane.f32.xlu0 %v448
        %v450 = vpop.xlane.xlu0 %449
        %v451 = vrcp.pop %v441
        %v452 = vmul.f32 %v441, %v451
        %v453 = vsub.f32 1.0, %v452
        %v454 = vmul.f32 %v451, %v453
        %v455 = vadd.f32 %v451, %v454
        %vm456 = vweird.f32 %v441
        %vm457 = vweird.f32 %v451
        %vm458 = vmor %vm456, %vm457
        %v459 = vsel %vm458, %v451, %v455
        %v460 = vand.u32 2147483647, %v441
        %vm461 = vcmp.eq.f32.partialorder %v460, 8.507059e+37
        %v462 = vand.u32 %v441, 2147483648
        %v463 = vor.u32 1.1754944e-38, %v462
        %v464 = vsel %vm461, %v463, %v459
        %v465 = vmul.f32 %v432, %v464
        %v466 = vrcp.pop %v444
        %v467 = vmul.f32 %v444, %v466
        %v468 = vsub.f32 1.0, %v467
        %v469 = vmul.f32 %v466, %v468
        %v470 = vadd.f32 %v466, %v469
        %vm471 = vweird.f32 %v444
        %vm472 = vweird.f32 %v466
        %vm473 = vmor %vm471, %vm472
        %v474 = vsel %vm473, %v466, %v470
        %v475 = vand.u32 2147483647, %v444
        %vm476 = vcmp.eq.f32.partialorder %v475, 8.507059e+37
        %v477 = vand.u32 %v444, 2147483648
        %v478 = vor.u32 1.1754944e-38, %v477
        %v479 = vsel %vm476, %v478, %v474
        %v480 = vmul.f32 %v434, %v479
        %v481 = vrcp.pop %v447
        %v482 = vmul.f32 %v447, %v481
        %v483 = vsub.f32 1.0, %v482
        %v484 = vmul.f32 %v481, %v483
        %v485 = vadd.f32 %v481, %v484
        %vm486 = vweird.f32 %v447
        %vm487 = vweird.f32 %v481
        %vm488 = vmor %vm486, %vm487
        %v489 = vsel %vm488, %v481, %v485
        %v490 = vand.u32 2147483647, %v447
        %vm491 = vcmp.eq.f32.partialorder %v490, 8.507059e+37
        %v492 = vand.u32 %v447, 2147483648
        %v493 = vor.u32 1.1754944e-38, %v492
        %v494 = vsel %vm491, %v493, %v489
        %v495 = vmul.f32 %v436, %v494
        %v496 = vrcp.pop %v450
        %v497 = vmul.f32 %v450, %v496
        %v498 = vsub.f32 1.0, %v497
        %v499 = vmul.f32 %v496, %v498
        %v500 = vadd.f32 %v496, %v499
        %vm501 = vweird.f32 %v450
        %vm502 = vweird.f32 %v496
        %vm503 = vmor %vm501, %vm502
        %v504 = vsel %vm503, %v496, %v500
        %v505 = vand.u32 2147483647, %v450
        %vm506 = vcmp.eq.f32.partialorder %v505, 8.507059e+37
        %v507 = vand.u32 %v450, 2147483648
        %v508 = vor.u32 1.1754944e-38, %v507
        %v509 = vsel %vm506, %v508, %v504
        %v510 = vmul.f32 %v438, %v509
        %511 = vst.msk [vmem:[%s285] sm:$0xff] %vm326, %v465
        %512 = vst.msk [vmem:[%s285 + $0x8] sm:$0xff] %vm326, %v480
        %513 = vst.msk [vmem:[%s285 + $0x10] sm:$0xff] %vm326, %v495
        %514 = vst.msk [vmem:[%s285 + $0x18] sm:$0xff] %vm326, %v510
        %v515 = vpack.c.bf16 %v465, %v465
        %516 = vrot.lane.b32.xlu0 %v322, 64
        %v517 = vpop.permute.xlu0 %516
        %v519 = vsel %vm326, %v515, 0
        %vm521 = vcmask 1043456
        %v523 = vsel %vm521, %v517, 0
        %525 = vmatpush.bf16.msra.mxu0 0
        %526 = vmatpush.bf16.msra.mxu0 0
        %527 = vmatpush.bf16.msra.mxu0 0
        %528 = vmatpush.bf16.msra.mxu0 0
        %529 = vmatpush.bf16.msra.mxu0 0
        %530 = vmatpush.bf16.msra.mxu0 0
        %531 = vmatpush.bf16.msra.mxu0 0
        %532 = vmatpush.bf16.msra.mxu0 %v523
        %533 = vmatmul.bf16.gmra.mxu0 %v519
        %v534 = vpop.f32.mrf.mxu0
        %v535 = vadd.f32 0.0, %v534
        %v536 = vpop.f32.mrf.mxu0
        %537 = vdwg.mxu0
        %v538 = vpack.c.bf16 %v480, %v480
        %539 = vrot.lane.b32.xlu0 %v322, 56
        %v540 = vpop.permute.xlu0 %539
        %v542 = vsel %vm326, %v538, 0
        %v545 = vsel %vm521, %v540, 0
        %547 = vmatpush.bf16.msra.mxu0 0
        %548 = vmatpush.bf16.msra.mxu0 0
        %549 = vmatpush.bf16.msra.mxu0 0
        %550 = vmatpush.bf16.msra.mxu0 0
        %551 = vmatpush.bf16.msra.mxu0 0
        %552 = vmatpush.bf16.msra.mxu0 0
        %553 = vmatpush.bf16.msra.mxu0 0
        %554 = vmatpush.bf16.msra.mxu0 %v545
        %555 = vmatmul.bf16.gmra.mxu0 %v542
        %v556 = vpop.f32.mrf.mxu0
        %v557 = vadd.f32 0.0, %v556
        %v558 = vpop.f32.mrf.mxu0
        %559 = vdwg.mxu0
        %v560 = vpack.c.bf16 %v495, %v495
        %561 = vrot.lane.b32.xlu0 %v322, 48
        %v562 = vpop.permute.xlu0 %561
        %v564 = vsel %vm326, %v560, 0
        %v567 = vsel %vm521, %v562, 0
        %569 = vmatpush.bf16.msra.mxu0 0
        %570 = vmatpush.bf16.msra.mxu0 0
        %571 = vmatpush.bf16.msra.mxu0 0
        %572 = vmatpush.bf16.msra.mxu0 0
        %573 = vmatpush.bf16.msra.mxu0 0
        %574 = vmatpush.bf16.msra.mxu0 0
        %575 = vmatpush.bf16.msra.mxu0 0
        %576 = vmatpush.bf16.msra.mxu0 %v567
        %577 = vmatmul.bf16.gmra.mxu0 %v564
        %v578 = vpop.f32.mrf.mxu0
        %v579 = vadd.f32 0.0, %v578
        %v580 = vpop.f32.mrf.mxu0
        %581 = vdwg.mxu0
        %v582 = vpack.c.bf16 %v510, %v510
        %583 = vrot.lane.b32.xlu0 %v322, 40
        %v584 = vpop.permute.xlu0 %583
        %v586 = vsel %vm326, %v582, 0
        %v589 = vsel %vm521, %v584, 0
        %591 = vmatpush.bf16.msra.mxu0 0
        %592 = vmatpush.bf16.msra.mxu0 0
        %593 = vmatpush.bf16.msra.mxu0 0
        %594 = vmatpush.bf16.msra.mxu0 0
        %595 = vmatpush.bf16.msra.mxu0 0
        %596 = vmatpush.bf16.msra.mxu0 0
        %597 = vmatpush.bf16.msra.mxu0 0
        %598 = vmatpush.bf16.msra.mxu0 %v589
        %599 = vmatmul.bf16.gmra.mxu0 %v586
        %v600 = vpop.f32.mrf.mxu0
        %v601 = vadd.f32 0.0, %v600
        %v602 = vpop.f32.mrf.mxu0
        %603 = vdwg.mxu0
        %605 = vrot.lane.b32.xlu0 %v557, 8
        %v606 = vpop.permute.xlu0 %605
        %609 = vrot.lane.b32.xlu0 %v579, 16
        %v610 = vpop.permute.xlu0 %609
        %613 = vrot.lane.b32.xlu0 %v601, 24
        %v614 = vpop.permute.xlu0 %613
        %v616 = vsel %vm326, %v535, %v606
        %vm617 = vcmask 130048
        %v618 = vsel %vm617, %v616, %v610
        %vm619 = vcmask 195584
        %v620 = vsel %vm619, %v618, %v614
        %v621 = vpack.c.bf16 %v620, %v620
        %v622 = vld [vmem:[#allocation7] sm:$0xf]
        %v623 = vld [vmem:[#allocation7 + $0x4] sm:$0xf]
        %v624 = vld [vmem:[#allocation7 + $0x8] sm:$0xf]
        %v625 = vld [vmem:[#allocation7 + $0xc] sm:$0xf]
        %v626 = vld [vmem:[%s3] sm:$0x1]
        %v628 = vperm.slane %v626, 0
        %v634 = vunpack.c.l.b16 %v622
        %v635 = vunpack.c.l.b16 %v623
        %v636 = vunpack.c.l.b16 %v624
        %v637 = vunpack.c.l.b16 %v625
        %v638 = vpack.c.b16 %v635, %v634
        %v639 = vpack.c.b16 %v637, %v636
        %v643 = vsel %vm305, %v621, 0
        %645 = vmatpush.bf16.msra.mxu0 0
        %646 = vmatpush.bf16.msra.mxu0 0
        %647 = vmatpush.bf16.msra.mxu0 0
        %648 = vmatpush.bf16.msra.mxu0 0
        %649 = vmatpush.bf16.msra.mxu0 0
        %650 = vmatpush.bf16.msra.mxu0 0
        %651 = vmatpush.bf16.msra.mxu0 %v639
        %652 = vmatpush.bf16.msra.mxu0 %v638
        %653 = vmatmul.bf16.gmra.mxu0 %v643
        %v654 = vpop.f32.mrf.mxu0
        %v655 = vadd.f32 %v628, %v654
        %v656 = vpop.f32.mrf.mxu0
        %657 = vdwg.mxu0
        %658 = vst.msk [vmem:[%s278] sm:$0xff] %vm305, %v655
        %s659 = sand.u32 %s124, 1
        %s660 = scalar_lea.sflag [#allocation4], %s659
        %s661 = sand.u32 %s124, 1
        %s662 = smul.addr %s661, 8
        %s663 = scalar_lea.vmem [#allocation8], %s662
        %s664 = sand.u32 %s150, 1
        %s665 = scalar_lea.sflag [#allocation10], %s664
        %s666 = sand.u32 %s150, 1
        %s667 = smul.addr %s666, 32
        %s668 = scalar_lea.vmem [#allocation9], %s667
        // Predicated region
        $region49: #{tpu_custom_call.1} parent=35 // pred_check
          %p669 = pneg %p134
        $region50: #{tpu_custom_call.1} parent=35 // pred_check_branch
          %671 = sbr.rel (%p669) target = $region52
        $region51: #{tpu_custom_call.1} parent=35 // pred_region
          %673 = vsyncadd %s660, 0
          %s674 = smul.addr %s27, 8
          %s675 = scalar_lea.hbm %s4, %s674
          %s677 = sshll.u32 %s663, 4
          %s678 = int_to_ptr.vmem [resolvable:$true] %s677
          %s679 = sshll.u32 %s675, 4
          %s680 = int_to_ptr.hbm [resolvable:$true] %s679
          %682 = dma.vmem_to_hbm [thread:$0]  %s678, 128, %s680, %s660
        $region52: #{tpu_custom_call.1} parent=35 // pred_fallthru
          _
        // Predicated region
        $region53: #{tpu_custom_call.1} parent=35 // pred_check
          %p683 = pneg %p160
        $region54: #{tpu_custom_call.1} parent=35 // pred_check_branch
          %685 = sbr.rel (%p683) target = $region56
        $region55: #{tpu_custom_call.1} parent=35 // pred_region
          %687 = vsyncadd %s665, 0
          %s688 = smul.addr %s27, 4
          %s689 = smul.addr %s688, 8
          %s690 = scalar_lea.hbm %s5, %s689
          %s691 = sshll.u32 %s668, 4
          %s692 = int_to_ptr.vmem [resolvable:$true] %s691
          %s693 = sshll.u32 %s690, 4
          %s694 = int_to_ptr.hbm [resolvable:$true] %s693
          %699 = dma.vmem_to_hbm [thread:$0]  %s692, 512, %s694, %s665, 128, 128, 8
        $region56: #{tpu_custom_call.1} parent=35 // pred_fallthru
          _
      $region36: #{tpu_custom_call.1} parent=5 // pred_fallthru
        _
      %p700 = scmp.le.s32.totalorder 2, %s22
      // Predicated region
      $region57: #{tpu_custom_call.1} parent=5 // pred_check
        %p701 = pneg %p700
      $region58: #{tpu_custom_call.1} parent=5 // pred_check_branch
        %703 = sbr.rel (%p701) target = $region60
      $region59: #{tpu_custom_call.1} parent=5 // pred_region
        %s704 = ssub.s32 %s22, 2
        // Predicated region
        $region61: #{tpu_custom_call.1} parent=59 // pred_check
          %p705 = pneg %p140
        $region62: #{tpu_custom_call.1} parent=59 // pred_check_branch
          %707 = sbr.rel (%p705) target = $region64
        $region63: #{tpu_custom_call.1} parent=59 // pred_region
          %s708 = sand.u32 %s125, 1
          %s709 = scalar_lea.sflag [#allocation4], %s708
          %s710 = sand.u32 %s125, 1
          %s711 = smul.addr %s710, 8
          %s712 = scalar_lea.vmem [#allocation8], %s711
          %714 = dma.done %s709, 128
        $region64: #{tpu_custom_call.1} parent=59 // pred_fallthru
          _
        // Predicated region
        $region65: #{tpu_custom_call.1} parent=59 // pred_check
          %p715 = pneg %p166
        $region66: #{tpu_custom_call.1} parent=59 // pred_check_branch
          %717 = sbr.rel (%p715) target = $region68
        $region67: #{tpu_custom_call.1} parent=59 // pred_region
          %s718 = sand.u32 %s151, 1
          %s719 = scalar_lea.sflag [#allocation10], %s718
          %s720 = sand.u32 %s151, 1
          %s721 = smul.addr %s720, 32
          %s722 = scalar_lea.vmem [#allocation9], %s721
          %724 = dma.done %s719, 512
        $region68: #{tpu_custom_call.1} parent=59 // pred_fallthru
          _
      $region60: #{tpu_custom_call.1} parent=5 // pred_fallthru
        _
    $region6: #{tpu_custom_call.1} parent=1 // loop_footer
      %s26 = sadd.s32 1, %s22
    $region7: #{tpu_custom_call.1} parent=1 // loop_footer_branch
      %21 = sbr.rel target = $region3
    $region8: #{tpu_custom_call.1} parent=1 // loop_exit
      _
    %725 = vsyncpa [#allocation3], 1
    %s726 = scalar_lea.sflag [#allocation3], 1
    %727 = vsyncpa %s726, 1
    %728 = vsyncpa [#allocation6], 1
    %729 = vsyncpa [#allocation4], 1
    %s730 = scalar_lea.sflag [#allocation4], 1
    %731 = vsyncpa %s730, 1
    %732 = vsyncpa [#allocation10], 1
    %s733 = scalar_lea.sflag [#allocation10], 1
    %734 = vsyncpa %s733, 1

</llo_original>
